<compile_context>
chip_gen: v6e
topology: v6e:2x2x1
jax: 0.10.0
libtpu: 0.0.40
codegen_flags: <defaults>
</compile_context>

<pallas_src>
import jax
import jax.numpy as jnp
from jax.experimental import pallas as pl
from jax.experimental.pallas import tpu as pltpu

HIDDEN = 16
INPUT = 1
OUTPUT = 1

# Packed parameter slab layout (rows x HIDDEN):
#   rows [0, HIDDEN)      : W_hh^T               (16, 16)
#   row  HIDDEN           : b_ih + b_hh          (16,)
#   row  HIDDEN + 1       : W_ih^T (input row)   (16,)   (INPUT == 1)
#   row  HIDDEN + 2       : W_lin row            (16,)   (OUTPUT == 1)
#   row  HIDDEN + 3       : b_lin broadcast      (16,)
#   rows [HIDDEN+4, 24)   : zero padding (sublane-multiple-of-8 rows)
SLAB_ROWS = 24


def rnn_linear_kernel(x_ref, h0_ref, slab_ref, out_ref):
    """Elman RNN (tanh) over the whole sequence + final Linear projection.

    x_ref:    (T, INPUT)          float32
    h0_ref:   (1, HIDDEN)         float32
    slab_ref: (SLAB_ROWS, HIDDEN) packed weights/biases (see layout above)
    out_ref:  (2, HIDDEN)         row 0 = h_final, row 1 = y_t lane-packed
                                  in lanes [0, T) (+ b_lin in padding lanes,
                                  sliced off by the wrapper).
    """
    T = x_ref.shape[0]

    w_hh = slab_ref[0:HIDDEN, :]                      # (16, 16) = W_hh^T
    b = slab_ref[HIDDEN:HIDDEN + 1, :]                # (1, 16)  = b_ih + b_hh
    w_ih_row = slab_ref[HIDDEN + 1:HIDDEN + 2, :]     # (1, 16)  = W_ih^T
    w_out_row = slab_ref[HIDDEN + 2:HIDDEN + 3, :]    # (1, 16)  = W_lin row
    b_out_row = slab_ref[HIDDEN + 3:HIDDEN + 4, :]    # (1, 16)  all = b_lin

    # Hoisted input projection + bias for every timestep (pure VPU broadcast,
    # no per-step bias add inside the recurrence).
    u = x_ref[...] * w_ih_row + b                     # (T, 16)

    # Lane index used to scatter y_t into the lane-packed output row.
    lane = jax.lax.broadcasted_iota(jnp.int32, (1, HIDDEN), 1)

    # Statically unrolled recurrence; only h, y_acc stay live across steps.
    h = h0_ref[...]                                   # (1, 16)
    y_acc = jnp.zeros((1, HIDDEN), jnp.float32)
    for t in range(T):
        h = jnp.tanh(u[t:t + 1, :] +
                     jnp.dot(h, w_hh, preferred_element_type=jnp.float32))
        # Linear(hidden -> 1) for this step: lane reduction, off the h->h
        # critical chain, merged into the accumulator with a lane select.
        y_t = jnp.sum(h * w_out_row, axis=-1, keepdims=True)   # (1, 1)
        y_acc = jnp.where(lane == t, y_t, y_acc)                # (1, 16)

    y_row = y_acc + b_out_row                         # bias; pad lanes discarded
    # Single aligned (2, 16) store: one writeback DMA for both outputs.
    out_ref[...] = jnp.concatenate([h, y_row], axis=0)


def prepare_params(params):
    """One-time parameter packing (transposes + bias fold happen here, NOT per call)."""
    w_ih, w_hh, b_ih, b_hh, w_lin, b_lin = params
    slab = jnp.zeros((SLAB_ROWS, HIDDEN), jnp.float32)
    slab = slab.at[0:HIDDEN, :].set(w_hh.T.astype(jnp.float32))
    slab = slab.at[HIDDEN, :].set((b_ih + b_hh).astype(jnp.float32))
    slab = slab.at[HIDDEN + 1, :].set(w_ih.reshape(HIDDEN).astype(jnp.float32))
    slab = slab.at[HIDDEN + 2, :].set(w_lin.reshape(HIDDEN).astype(jnp.float32))
    slab = slab.at[HIDDEN + 3, :].set(
        jnp.broadcast_to(b_lin.astype(jnp.float32).reshape(-1)[0], (HIDDEN,)))
    return slab


def net_forward(x, hidden_prev, slab):
    """Mirrors Net.forward: returns (out, hidden_prev_new).

    x:           (1, T, INPUT)  (batch_first, batch = 1)
    hidden_prev: (1, 1, HIDDEN)
    slab:        (SLAB_ROWS, HIDDEN) packed parameters from prepare_params()
    out:         (1, T, OUTPUT)
    """
    B, T, D_in = x.shape
    assert B == 1 and D_in == INPUT, "kernel is specialized to batch=1, input_size=1"
    assert hidden_prev.shape == (1, 1, HIDDEN)
    assert T <= HIDDEN, "T > 16 needs the grid-over-T variant (see TODO)"

    x2 = x.reshape(T, INPUT).astype(jnp.float32)
    h0 = hidden_prev.reshape(1, HIDDEN).astype(jnp.float32)

    packed = pl.pallas_call(
        rnn_linear_kernel,
        out_shape=jax.ShapeDtypeStruct((2, HIDDEN), jnp.float32),
        in_specs=[
            pl.BlockSpec(memory_space=pltpu.MemorySpace.VMEM),
            pl.BlockSpec(memory_space=pltpu.MemorySpace.VMEM),
            pl.BlockSpec(memory_space=pltpu.MemorySpace.VMEM),
        ],
        out_specs=pl.BlockSpec(memory_space=pltpu.MemorySpace.VMEM),
    )(x2, h0, slab)

    hidden = packed[0:1, :].reshape(1, 1, HIDDEN)
    out = packed[1, 0:T].reshape(1, T, OUTPUT)
    return out, hidden


def make_params(key):
    k1, k2, k3, k4, k5, k6 = jax.random.split(key, 6)
    # RNN params: nn.init.normal_(p, mean=0.0, std=0.001)
    w_ih = 0.001 * jax.random.normal(k1, (HIDDEN, INPUT), jnp.float32)
    w_hh = 0.001 * jax.random.normal(k2, (HIDDEN, HIDDEN), jnp.float32)
    b_ih = 0.001 * jax.random.normal(k3, (HIDDEN,), jnp.float32)
    b_hh = 0.001 * jax.random.normal(k4, (HIDDEN,), jnp.float32)
    # Linear default init: U(-1/sqrt(H), 1/sqrt(H))
    bound = 1.0 / (HIDDEN ** 0.5)
    w_lin = jax.random.uniform(k5, (OUTPUT, HIDDEN), jnp.float32, -bound, bound)
    b_lin = jax.random.uniform(k6, (OUTPUT,), jnp.float32, -bound, bound)
    return (w_ih, w_hh, b_ih, b_hh, w_lin, b_lin)


def reference_forward(x, hidden_prev, params):
    """Pure-JAX reference matching torch semantics."""
    w_ih, w_hh, b_ih, b_hh, w_lin, b_lin = params
    T = x.shape[1]
    h = hidden_prev.reshape(1, HIDDEN)
    hs = []
    for t in range(T):
        x_t = x[0, t:t + 1, :]                             # (1, INPUT)
        h = jnp.tanh(x_t @ w_ih.T + b_ih + h @ w_hh.T + b_hh)
        hs.append(h)
    hs = jnp.concatenate(hs, axis=0)                       # (T, HIDDEN)
    out = hs @ w_lin.T + b_lin                             # (T, OUTPUT)
    return out.reshape(1, T, OUTPUT), h.reshape(1, 1, HIDDEN)


if __name__ == "__main__":
    key = jax.random.PRNGKey(0)
    pkey, xkey = jax.random.split(key)
    params = make_params(pkey)
    slab = prepare_params(params)          # packed once, reused across calls

    T = 8
    x = jax.random.normal(xkey, (1, T, INPUT), jnp.float32)   # batch_first (1, T, 1)
    hidden_prev = jnp.zeros((1, 1, HIDDEN), jnp.float32)

    out, hidden = net_forward(x, hidden_prev, slab)
    jax.block_until_ready((out, hidden))

    assert out.shape == (1, T, OUTPUT)
    assert hidden.shape == (1, 1, HIDDEN)

    # Correctness check against a pure-JAX reference of the PyTorch module.
    ref_out, ref_hidden = reference_forward(x, hidden_prev, params)
    assert jnp.allclose(out, ref_out, rtol=1e-4, atol=1e-4)
    assert jnp.allclose(hidden, ref_hidden, rtol=1e-4, atol=1e-4)

    print("KERNEL_OK")
</pallas_src>

<mosaic_0001>
module attributes {stable_mosaic.version = 11 : i64} {
  func.func @rnn_linear_kernel(%arg0: memref<8x1xf32, #tpu.memory_space<vmem>>, %arg1: memref<1x16xf32, #tpu.memory_space<vmem>>, %arg2: memref<24x16xf32, #tpu.memory_space<vmem>>, %arg3: memref<2x16xf32, #tpu.memory_space<vmem>>) attributes {dimension_semantics = [], scalar_prefetch = 0 : i64, scratch_operands = 0 : i64, tpu.core_type = #tpu.core_type<tc>} {
    %c0 = arith.constant 0 : index
    %c0_0 = arith.constant 0 : index
    %0 = vector.load %arg2[%c0, %c0_0] : memref<24x16xf32, #tpu.memory_space<vmem>>, vector<16x16xf32>
    %c16 = arith.constant 16 : index
    %c0_1 = arith.constant 0 : index
    %1 = vector.load %arg2[%c16, %c0_1] : memref<24x16xf32, #tpu.memory_space<vmem>>, vector<1x16xf32>
    %c17 = arith.constant 17 : index
    %c0_2 = arith.constant 0 : index
    %2 = vector.load %arg2[%c17, %c0_2] : memref<24x16xf32, #tpu.memory_space<vmem>>, vector<1x16xf32>
    %c18 = arith.constant 18 : index
    %c0_3 = arith.constant 0 : index
    %3 = vector.load %arg2[%c18, %c0_3] : memref<24x16xf32, #tpu.memory_space<vmem>>, vector<1x16xf32>
    %c19 = arith.constant 19 : index
    %c0_4 = arith.constant 0 : index
    %4 = vector.load %arg2[%c19, %c0_4] : memref<24x16xf32, #tpu.memory_space<vmem>>, vector<1x16xf32>
    %c0_5 = arith.constant 0 : index
    %c0_6 = arith.constant 0 : index
    %5 = vector.load %arg0[%c0_5, %c0_6] : memref<8x1xf32, #tpu.memory_space<vmem>>, vector<8x1xf32>
    %6 = vector.broadcast %5 : vector<8x1xf32> to vector<8x16xf32>
    %7 = vector.broadcast %2 : vector<1x16xf32> to vector<8x16xf32>
    %8 = arith.mulf %6, %7 : vector<8x16xf32>
    %9 = vector.broadcast %1 : vector<1x16xf32> to vector<8x16xf32>
    %10 = arith.addf %8, %9 : vector<8x16xf32>
    %11 = tpu.iota {dimensions = array<i32: 1>} : vector<1x16xi32>
    %c0_7 = arith.constant 0 : index
    %c0_8 = arith.constant 0 : index
    %12 = vector.load %arg1[%c0_7, %c0_8] : memref<1x16xf32, #tpu.memory_space<vmem>>, vector<1x16xf32>
    %cst = arith.constant 0.000000e+00 : f32
    %13 = vector.broadcast %cst : f32 to vector<1x16xf32>
    %14 = vector.extract_strided_slice %10 {offsets = [0, 0], sizes = [1, 16], strides = [1, 1]} : vector<8x16xf32> to vector<1x16xf32>
    %cst_9 = arith.constant dense<0.000000e+00> : vector<1x16xf32>
    %15 = tpu.matmul %12, %0, %cst_9 {dimension_numbers = #tpu.dot_dimension_numbers<[1], [0], [0], [1], [0, 0, 1, 1], [], []>} : vector<1x16xf32>, vector<16x16xf32>, vector<1x16xf32> -> vector<1x16xf32>
    %16 = arith.addf %14, %15 : vector<1x16xf32>
    %17 = math.tanh %16 : vector<1x16xf32>
    %18 = arith.mulf %17, %3 : vector<1x16xf32>
    %cst_10 = arith.constant dense<0.000000e+00> : vector<1xf32>
    %19 = vector.multi_reduction <add>, %18, %cst_10 [1] : vector<1x16xf32> to vector<1xf32>
    %20 = vector.shape_cast %19 : vector<1xf32> to vector<1x1xf32>
    %c0_i32 = arith.constant 0 : i32
    %21 = vector.broadcast %c0_i32 : i32 to vector<1x16xi32>
    %22 = arith.cmpi eq, %11, %21 : vector<1x16xi32>
    %23 = vector.shape_cast %20 : vector<1x1xf32> to vector<1x1xf32>
    %24 = vector.broadcast %23 : vector<1x1xf32> to vector<1x16xf32>
    %25 = arith.select %22, %24, %13 : vector<1x16xi1>, vector<1x16xf32>
    %26 = vector.extract_strided_slice %10 {offsets = [1, 0], sizes = [1, 16], strides = [1, 1]} : vector<8x16xf32> to vector<1x16xf32>
    %cst_11 = arith.constant dense<0.000000e+00> : vector<1x16xf32>
    %27 = tpu.matmul %17, %0, %cst_11 {dimension_numbers = #tpu.dot_dimension_numbers<[1], [0], [0], [1], [0, 0, 1, 1], [], []>} : vector<1x16xf32>, vector<16x16xf32>, vector<1x16xf32> -> vector<1x16xf32>
    %28 = arith.addf %26, %27 : vector<1x16xf32>
    %29 = math.tanh %28 : vector<1x16xf32>
    %30 = arith.mulf %29, %3 : vector<1x16xf32>
    %cst_12 = arith.constant dense<0.000000e+00> : vector<1xf32>
    %31 = vector.multi_reduction <add>, %30, %cst_12 [1] : vector<1x16xf32> to vector<1xf32>
    %32 = vector.shape_cast %31 : vector<1xf32> to vector<1x1xf32>
    %c1_i32 = arith.constant 1 : i32
    %33 = vector.broadcast %c1_i32 : i32 to vector<1x16xi32>
    %34 = arith.cmpi eq, %11, %33 : vector<1x16xi32>
    %35 = vector.shape_cast %32 : vector<1x1xf32> to vector<1x1xf32>
    %36 = vector.broadcast %35 : vector<1x1xf32> to vector<1x16xf32>
    %37 = arith.select %34, %36, %25 : vector<1x16xi1>, vector<1x16xf32>
    %38 = vector.extract_strided_slice %10 {offsets = [2, 0], sizes = [1, 16], strides = [1, 1]} : vector<8x16xf32> to vector<1x16xf32>
    %cst_13 = arith.constant dense<0.000000e+00> : vector<1x16xf32>
    %39 = tpu.matmul %29, %0, %cst_13 {dimension_numbers = #tpu.dot_dimension_numbers<[1], [0], [0], [1], [0, 0, 1, 1], [], []>} : vector<1x16xf32>, vector<16x16xf32>, vector<1x16xf32> -> vector<1x16xf32>
    %40 = arith.addf %38, %39 : vector<1x16xf32>
    %41 = math.tanh %40 : vector<1x16xf32>
    %42 = arith.mulf %41, %3 : vector<1x16xf32>
    %cst_14 = arith.constant dense<0.000000e+00> : vector<1xf32>
    %43 = vector.multi_reduction <add>, %42, %cst_14 [1] : vector<1x16xf32> to vector<1xf32>
    %44 = vector.shape_cast %43 : vector<1xf32> to vector<1x1xf32>
    %c2_i32 = arith.constant 2 : i32
    %45 = vector.broadcast %c2_i32 : i32 to vector<1x16xi32>
    %46 = arith.cmpi eq, %11, %45 : vector<1x16xi32>
    %47 = vector.shape_cast %44 : vector<1x1xf32> to vector<1x1xf32>
    %48 = vector.broadcast %47 : vector<1x1xf32> to vector<1x16xf32>
    %49 = arith.select %46, %48, %37 : vector<1x16xi1>, vector<1x16xf32>
    %50 = vector.extract_strided_slice %10 {offsets = [3, 0], sizes = [1, 16], strides = [1, 1]} : vector<8x16xf32> to vector<1x16xf32>
    %cst_15 = arith.constant dense<0.000000e+00> : vector<1x16xf32>
    %51 = tpu.matmul %41, %0, %cst_15 {dimension_numbers = #tpu.dot_dimension_numbers<[1], [0], [0], [1], [0, 0, 1, 1], [], []>} : vector<1x16xf32>, vector<16x16xf32>, vector<1x16xf32> -> vector<1x16xf32>
    %52 = arith.addf %50, %51 : vector<1x16xf32>
    %53 = math.tanh %52 : vector<1x16xf32>
    %54 = arith.mulf %53, %3 : vector<1x16xf32>
    %cst_16 = arith.constant dense<0.000000e+00> : vector<1xf32>
    %55 = vector.multi_reduction <add>, %54, %cst_16 [1] : vector<1x16xf32> to vector<1xf32>
    %56 = vector.shape_cast %55 : vector<1xf32> to vector<1x1xf32>
    %c3_i32 = arith.constant 3 : i32
    %57 = vector.broadcast %c3_i32 : i32 to vector<1x16xi32>
    %58 = arith.cmpi eq, %11, %57 : vector<1x16xi32>
    %59 = vector.shape_cast %56 : vector<1x1xf32> to vector<1x1xf32>
    %60 = vector.broadcast %59 : vector<1x1xf32> to vector<1x16xf32>
    %61 = arith.select %58, %60, %49 : vector<1x16xi1>, vector<1x16xf32>
    %62 = vector.extract_strided_slice %10 {offsets = [4, 0], sizes = [1, 16], strides = [1, 1]} : vector<8x16xf32> to vector<1x16xf32>
    %cst_17 = arith.constant dense<0.000000e+00> : vector<1x16xf32>
    %63 = tpu.matmul %53, %0, %cst_17 {dimension_numbers = #tpu.dot_dimension_numbers<[1], [0], [0], [1], [0, 0, 1, 1], [], []>} : vector<1x16xf32>, vector<16x16xf32>, vector<1x16xf32> -> vector<1x16xf32>
    %64 = arith.addf %62, %63 : vector<1x16xf32>
    %65 = math.tanh %64 : vector<1x16xf32>
    %66 = arith.mulf %65, %3 : vector<1x16xf32>
    %cst_18 = arith.constant dense<0.000000e+00> : vector<1xf32>
    %67 = vector.multi_reduction <add>, %66, %cst_18 [1] : vector<1x16xf32> to vector<1xf32>
    %68 = vector.shape_cast %67 : vector<1xf32> to vector<1x1xf32>
    %c4_i32 = arith.constant 4 : i32
    %69 = vector.broadcast %c4_i32 : i32 to vector<1x16xi32>
    %70 = arith.cmpi eq, %11, %69 : vector<1x16xi32>
    %71 = vector.shape_cast %68 : vector<1x1xf32> to vector<1x1xf32>
    %72 = vector.broadcast %71 : vector<1x1xf32> to vector<1x16xf32>
    %73 = arith.select %70, %72, %61 : vector<1x16xi1>, vector<1x16xf32>
    %74 = vector.extract_strided_slice %10 {offsets = [5, 0], sizes = [1, 16], strides = [1, 1]} : vector<8x16xf32> to vector<1x16xf32>
    %cst_19 = arith.constant dense<0.000000e+00> : vector<1x16xf32>
    %75 = tpu.matmul %65, %0, %cst_19 {dimension_numbers = #tpu.dot_dimension_numbers<[1], [0], [0], [1], [0, 0, 1, 1], [], []>} : vector<1x16xf32>, vector<16x16xf32>, vector<1x16xf32> -> vector<1x16xf32>
    %76 = arith.addf %74, %75 : vector<1x16xf32>
    %77 = math.tanh %76 : vector<1x16xf32>
    %78 = arith.mulf %77, %3 : vector<1x16xf32>
    %cst_20 = arith.constant dense<0.000000e+00> : vector<1xf32>
    %79 = vector.multi_reduction <add>, %78, %cst_20 [1] : vector<1x16xf32> to vector<1xf32>
    %80 = vector.shape_cast %79 : vector<1xf32> to vector<1x1xf32>
    %c5_i32 = arith.constant 5 : i32
    %81 = vector.broadcast %c5_i32 : i32 to vector<1x16xi32>
    %82 = arith.cmpi eq, %11, %81 : vector<1x16xi32>
    %83 = vector.shape_cast %80 : vector<1x1xf32> to vector<1x1xf32>
    %84 = vector.broadcast %83 : vector<1x1xf32> to vector<1x16xf32>
    %85 = arith.select %82, %84, %73 : vector<1x16xi1>, vector<1x16xf32>
    %86 = vector.extract_strided_slice %10 {offsets = [6, 0], sizes = [1, 16], strides = [1, 1]} : vector<8x16xf32> to vector<1x16xf32>
    %cst_21 = arith.constant dense<0.000000e+00> : vector<1x16xf32>
    %87 = tpu.matmul %77, %0, %cst_21 {dimension_numbers = #tpu.dot_dimension_numbers<[1], [0], [0], [1], [0, 0, 1, 1], [], []>} : vector<1x16xf32>, vector<16x16xf32>, vector<1x16xf32> -> vector<1x16xf32>
    %88 = arith.addf %86, %87 : vector<1x16xf32>
    %89 = math.tanh %88 : vector<1x16xf32>
    %90 = arith.mulf %89, %3 : vector<1x16xf32>
    %cst_22 = arith.constant dense<0.000000e+00> : vector<1xf32>
    %91 = vector.multi_reduction <add>, %90, %cst_22 [1] : vector<1x16xf32> to vector<1xf32>
    %92 = vector.shape_cast %91 : vector<1xf32> to vector<1x1xf32>
    %c6_i32 = arith.constant 6 : i32
    %93 = vector.broadcast %c6_i32 : i32 to vector<1x16xi32>
    %94 = arith.cmpi eq, %11, %93 : vector<1x16xi32>
    %95 = vector.shape_cast %92 : vector<1x1xf32> to vector<1x1xf32>
    %96 = vector.broadcast %95 : vector<1x1xf32> to vector<1x16xf32>
    %97 = arith.select %94, %96, %85 : vector<1x16xi1>, vector<1x16xf32>
    %98 = vector.extract_strided_slice %10 {offsets = [7, 0], sizes = [1, 16], strides = [1, 1]} : vector<8x16xf32> to vector<1x16xf32>
    %cst_23 = arith.constant dense<0.000000e+00> : vector<1x16xf32>
    %99 = tpu.matmul %89, %0, %cst_23 {dimension_numbers = #tpu.dot_dimension_numbers<[1], [0], [0], [1], [0, 0, 1, 1], [], []>} : vector<1x16xf32>, vector<16x16xf32>, vector<1x16xf32> -> vector<1x16xf32>
    %100 = arith.addf %98, %99 : vector<1x16xf32>
    %101 = math.tanh %100 : vector<1x16xf32>
    %102 = arith.mulf %101, %3 : vector<1x16xf32>
    %cst_24 = arith.constant dense<0.000000e+00> : vector<1xf32>
    %103 = vector.multi_reduction <add>, %102, %cst_24 [1] : vector<1x16xf32> to vector<1xf32>
    %104 = vector.shape_cast %103 : vector<1xf32> to vector<1x1xf32>
    %c7_i32 = arith.constant 7 : i32
    %105 = vector.broadcast %c7_i32 : i32 to vector<1x16xi32>
    %106 = arith.cmpi eq, %11, %105 : vector<1x16xi32>
    %107 = vector.shape_cast %104 : vector<1x1xf32> to vector<1x1xf32>
    %108 = vector.broadcast %107 : vector<1x1xf32> to vector<1x16xf32>
    %109 = arith.select %106, %108, %97 : vector<1x16xi1>, vector<1x16xf32>
    %110 = arith.addf %109, %4 : vector<1x16xf32>
    %111 = tpu.concatenate %101, %110 in 0 : vector<1x16xf32>, vector<1x16xf32> -> vector<2x16xf32>
    %c0_25 = arith.constant 0 : index
    %c0_26 = arith.constant 0 : index
    %112 = vector.load %arg3[%c0_25, %c0_26] : memref<2x16xf32, #tpu.memory_space<vmem>>, vector<2x16xf32>
    tpu.vector_store %arg3[%c0_25, %c0_26], %111 {strides = array<i32>} : memref<2x16xf32, #tpu.memory_space<vmem>>, vector<2x16xf32>,
    return
  }
}

</mosaic_0001>

<llo_original>
// kernel: tpu_custom_call.1
$region0: #{tpu_custom_call.1}
  #allocation0 [shape = 'u32[]', space=smem, size = 0x4, offset = 0x4, fixed_abs, tag = 'smem constant byte address 0x4 - core index']
  #allocation1 [shape = 'u32[144,128]{1,0:T(1,128)}', space=vmem, size = 0x12000, scoped, tag = 'internal scratch']
  %s0 = inlined_call_operand.vmem [shape: f32[8,1], index: 0, kind: input, shape index: {}]
  %s1 = inlined_call_operand.vmem [shape: f32[1,16], index: 1, kind: input, shape index: {}]
  %s2 = inlined_call_operand.vmem [shape: f32[24,16], index: 2, kind: input, shape index: {}]
  %s3 = inlined_call_operand.hbm [shape: f32[2,16], index: 3, kind: output, shape index: {}]
  %s4 = sld [smem:[#allocation0]]
  $region22: #{tpu_custom_call.1} parent=0
    _
  %s6 = ssub.s32 1, %s4
  %s7 = scalar_select 0, %s6, %s4
  $region1: #{tpu_custom_call.1} parent=0
    #allocation2 [shape = 'u8[1024]{0}', space=vmem, size = 0x400, scoped, tag = 'output window, operand 0, single buffered']
    #allocation3 [shape = 's32[1]{0}', space=sflag, size = 0x4, scoped, tag = 'scoped memory for tpu_custom_call.1']
    %8 = vsyncpa [#allocation3], 0
    // Predicated region
    $region2: #{tpu_custom_call.1} parent=1 // pred_check
      _
    $region3: #{tpu_custom_call.1} parent=1 // pred_check_branch
      %10 = sbr.rel (0) target = $region5
    $region4: #{tpu_custom_call.1} parent=1 // pred_region
      _
    $region5: #{tpu_custom_call.1} parent=1 // pred_fallthru
      _
    // Predicated region
    $region6: #{tpu_custom_call.1} parent=1 // pred_check
      _
    $region7: #{tpu_custom_call.1} parent=1 // pred_check_branch
      %12 = sbr.rel (0) target = $region9
    $region8: #{tpu_custom_call.1} parent=1 // pred_region
      _
    $region9: #{tpu_custom_call.1} parent=1 // pred_fallthru
      _
    // Predicated region
    $region10: #{tpu_custom_call.1} parent=1 // pred_check
      _
    $region11: #{tpu_custom_call.1} parent=1 // pred_check_branch
      %14 = sbr.rel (0) target = $region13
    $region12: #{tpu_custom_call.1} parent=1 // pred_region
      _
    $region13: #{tpu_custom_call.1} parent=1 // pred_fallthru
      _
    %v15 = vld [vmem:[%s2] sm:$0xff]
    %v16 = vld [vmem:[%s2 + $0x8] sm:$0xff]
    %v17 = vld [vmem:[%s2 + $0x10] sm:$0x1]
    %v18 = vld [vmem:[%s2 + $0x11] sm:$0x1]
    %v19 = vld [vmem:[%s2 + $0x12] sm:$0x1]
    %v20 = vld [vmem:[%s2 + $0x13] sm:$0x1]
    %v21 = vld [vmem:[%s0] sm:$0xff]
    %23 = vset.pattern.permute.xlu0 0
    %24 = vperm.xlu0 %23, %v21
    %v25 = vpop.permute.xlu0 %24
    %v27 = vlaneseq
    %v28 = vshrl.u32 %v27, 7
    %v29 = vsub.s32 0, %v28
    %v30 = vrot.slane %v18, %v29
    %v31 = vmul.f32 %v25, %v30
    %v32 = vlaneseq
    %v33 = vshrl.u32 %v32, 7
    %v34 = vsub.s32 0, %v33
    %v35 = vrot.slane %v17, %v34
    %v36 = vadd.f32 %v31, %v35
    %v37 = vlaneseq
    %v38 = vand.u32 %v37, 127
    %v39 = vld [vmem:[%s1] sm:$0x1]
    %vm40 = vcmask 130048
    %v42 = vsel %vm40, %v39, 0
    %44 = vmatprep.subr.mxu0 0.0
    %45 = vmatpush1.msra.mxu0 0.0
    %46 = vmatprep.subr.mxu0 0.0
    %47 = vmatpush1.msra.mxu0 0.0
    %48 = vmatprep.subr.mxu0 0.0
    %49 = vmatpush1.msra.mxu0 0.0
    %50 = vmatprep.subr.mxu0 0.0
    %51 = vmatpush1.msra.mxu0 0.0
    %52 = vmatprep.subr.mxu0 0.0
    %53 = vmatpush1.msra.mxu0 0.0
    %54 = vmatprep.subr.mxu0 0.0
    %55 = vmatpush1.msra.mxu0 0.0
    %56 = vmatprep.subr.mxu0 0.0
    %57 = vmatpush1.msra.mxu0 0.0
    %58 = vmatprep.subr.mxu0 0.0
    %59 = vmatpush1.msra.mxu0 0.0
    %60 = vmatprep.subr.mxu0 0.0
    %61 = vmatpush1.msra.mxu0 0.0
    %62 = vmatprep.subr.mxu0 0.0
    %63 = vmatpush1.msra.mxu0 0.0
    %64 = vmatprep.subr.mxu0 0.0
    %65 = vmatpush1.msra.mxu0 0.0
    %66 = vmatprep.subr.mxu0 0.0
    %67 = vmatpush1.msra.mxu0 0.0
    %68 = vmatprep.subr.mxu0 0.0
    %69 = vmatpush1.msra.mxu0 0.0
    %70 = vmatprep.subr.mxu0 0.0
    %71 = vmatpush1.msra.mxu0 0.0
    %72 = vmatprep.subr.mxu0 0.0
    %73 = vmatpush1.msra.mxu0 %v16
    %74 = vmatprep.subr.mxu0 0.0
    %75 = vmatpush1.msra.mxu0 %v15
    %76 = vmatprep.subr.mxu0 0.0
    %77 = vmatpush2.msra.mxu0 0.0
    %78 = vmatprep.subr.mxu0 0.0
    %79 = vmatpush2.msra.mxu0 0.0
    %80 = vmatprep.subr.mxu0 0.0
    %81 = vmatpush2.msra.mxu0 0.0
    %82 = vmatprep.subr.mxu0 0.0
    %83 = vmatpush2.msra.mxu0 0.0
    %84 = vmatprep.subr.mxu0 0.0
    %85 = vmatpush2.msra.mxu0 0.0
    %86 = vmatprep.subr.mxu0 0.0
    %87 = vmatpush2.msra.mxu0 0.0
    %88 = vmatprep.subr.mxu0 0.0
    %89 = vmatpush2.msra.mxu0 0.0
    %90 = vmatprep.subr.mxu0 0.0
    %91 = vmatpush2.msra.mxu0 0.0
    %92 = vmatprep.subr.mxu0 0.0
    %93 = vmatpush2.msra.mxu0 0.0
    %94 = vmatprep.subr.mxu0 0.0
    %95 = vmatpush2.msra.mxu0 0.0
    %96 = vmatprep.subr.mxu0 0.0
    %97 = vmatpush2.msra.mxu0 0.0
    %98 = vmatprep.subr.mxu0 0.0
    %99 = vmatpush2.msra.mxu0 0.0
    %100 = vmatprep.subr.mxu0 0.0
    %101 = vmatpush2.msra.mxu0 0.0
    %102 = vmatprep.subr.mxu0 0.0
    %103 = vmatpush2.msra.mxu0 0.0
    %104 = vmatprep.subr.mxu0 0.0
    %105 = vmatpush2.msra.mxu0 0.0
    %106 = vmatprep.subr.mxu0 0.0
    %107 = vmatpush2.msra.mxu0 0.0
    %108 = vmatprep.mubr.f32.mxu0 0.0
    %109 = vmatmul.mubr.f32.gmra.mxu0 %v42
    %v110 = vpop.f32.mrf.mxu0
    %v111 = vadd.f32 0.0, %v110
    %v112 = vpop.f32.mrf.mxu0
    %113 = vdwg.mxu0
    %v114 = vadd.f32 %v36, %v111
    %v115 = vtanh.pop %v114
    %v116 = vmul.f32 %v115, %v19
    %vm117 = vcmask 122880
    %v118 = vsel %vm117, %v116, 0.0
    %119 = vadd.xlane.f32.xlu0 %v118
    %v120 = vpop.xlane.xlu0 %119
    %vm121 = vcmp.eq.s32.totalorder %v38, 0
    %v122 = vsel %vm121, %v120, 0.0
    %v124 = vsel %vm40, %v115, 0
    %126 = vmatprep.subr.mxu0 0.0
    %127 = vmatpush1.msra.mxu0 0.0
    %128 = vmatprep.subr.mxu0 0.0
    %129 = vmatpush1.msra.mxu0 0.0
    %130 = vmatprep.subr.mxu0 0.0
    %131 = vmatpush1.msra.mxu0 0.0
    %132 = vmatprep.subr.mxu0 0.0
    %133 = vmatpush1.msra.mxu0 0.0
    %134 = vmatprep.subr.mxu0 0.0
    %135 = vmatpush1.msra.mxu0 0.0
    %136 = vmatprep.subr.mxu0 0.0
    %137 = vmatpush1.msra.mxu0 0.0
    %138 = vmatprep.subr.mxu0 0.0
    %139 = vmatpush1.msra.mxu0 0.0
    %140 = vmatprep.subr.mxu0 0.0
    %141 = vmatpush1.msra.mxu0 0.0
    %142 = vmatprep.subr.mxu0 0.0
    %143 = vmatpush1.msra.mxu0 0.0
    %144 = vmatprep.subr.mxu0 0.0
    %145 = vmatpush1.msra.mxu0 0.0
    %146 = vmatprep.subr.mxu0 0.0
    %147 = vmatpush1.msra.mxu0 0.0
    %148 = vmatprep.subr.mxu0 0.0
    %149 = vmatpush1.msra.mxu0 0.0
    %150 = vmatprep.subr.mxu0 0.0
    %151 = vmatpush1.msra.mxu0 0.0
    %152 = vmatprep.subr.mxu0 0.0
    %153 = vmatpush1.msra.mxu0 0.0
    %154 = vmatprep.subr.mxu0 0.0
    %155 = vmatpush1.msra.mxu0 %v16
    %156 = vmatprep.subr.mxu0 0.0
    %157 = vmatpush1.msra.mxu0 %v15
    %158 = vmatprep.subr.mxu0 0.0
    %159 = vmatpush2.msra.mxu0 0.0
    %160 = vmatprep.subr.mxu0 0.0
    %161 = vmatpush2.msra.mxu0 0.0
    %162 = vmatprep.subr.mxu0 0.0
    %163 = vmatpush2.msra.mxu0 0.0
    %164 = vmatprep.subr.mxu0 0.0
    %165 = vmatpush2.msra.mxu0 0.0
    %166 = vmatprep.subr.mxu0 0.0
    %167 = vmatpush2.msra.mxu0 0.0
    %168 = vmatprep.subr.mxu0 0.0
    %169 = vmatpush2.msra.mxu0 0.0
    %170 = vmatprep.subr.mxu0 0.0
    %171 = vmatpush2.msra.mxu0 0.0
    %172 = vmatprep.subr.mxu0 0.0
    %173 = vmatpush2.msra.mxu0 0.0
    %174 = vmatprep.subr.mxu0 0.0
    %175 = vmatpush2.msra.mxu0 0.0
    %176 = vmatprep.subr.mxu0 0.0
    %177 = vmatpush2.msra.mxu0 0.0
    %178 = vmatprep.subr.mxu0 0.0
    %179 = vmatpush2.msra.mxu0 0.0
    %180 = vmatprep.subr.mxu0 0.0
    %181 = vmatpush2.msra.mxu0 0.0
    %182 = vmatprep.subr.mxu0 0.0
    %183 = vmatpush2.msra.mxu0 0.0
    %184 = vmatprep.subr.mxu0 0.0
    %185 = vmatpush2.msra.mxu0 0.0
    %186 = vmatprep.subr.mxu0 0.0
    %187 = vmatpush2.msra.mxu0 0.0
    %188 = vmatprep.subr.mxu0 0.0
    %189 = vmatpush2.msra.mxu0 0.0
    %190 = vmatprep.mubr.f32.mxu0 0.0
    %191 = vmatmul.mubr.f32.gmra.mxu0 %v124
    %v192 = vpop.f32.mrf.mxu0
    %v193 = vadd.f32 0.0, %v192
    %v194 = vpop.f32.mrf.mxu0
    %195 = vdwg.mxu0
    %v197 = vrot.slane %v193, 7
    %v199 = vadd.f32 %v36, %v197
    %v200 = vtanh.pop %v199
    %v202 = vrot.slane %v19, 7
    %v204 = vmul.f32 %v200, %v202
    %vm205 = vcmask 123905
    %v206 = vsel %vm205, %v204, 0.0
    %207 = vadd.xlane.f32.xlu0 %v206
    %v208 = vpop.xlane.xlu0 %207
    %vm209 = vcmp.eq.s32.totalorder %v38, 1
    %v211 = vrot.slane %v122, 7
    %v213 = vsel %vm209, %v208, %v211
    %v215 = vrot.slane %v200, 1
    %v216 = vsel %vm40, %v215, 0
    %218 = vmatprep.subr.mxu0 0.0
    %219 = vmatpush1.msra.mxu0 0.0
    %220 = vmatprep.subr.mxu0 0.0
    %221 = vmatpush1.msra.mxu0 0.0
    %222 = vmatprep.subr.mxu0 0.0
    %223 = vmatpush1.msra.mxu0 0.0
    %224 = vmatprep.subr.mxu0 0.0
    %225 = vmatpush1.msra.mxu0 0.0
    %226 = vmatprep.subr.mxu0 0.0
    %227 = vmatpush1.msra.mxu0 0.0
    %228 = vmatprep.subr.mxu0 0.0
    %229 = vmatpush1.msra.mxu0 0.0
    %230 = vmatprep.subr.mxu0 0.0
    %231 = vmatpush1.msra.mxu0 0.0
    %232 = vmatprep.subr.mxu0 0.0
    %233 = vmatpush1.msra.mxu0 0.0
    %234 = vmatprep.subr.mxu0 0.0
    %235 = vmatpush1.msra.mxu0 0.0
    %236 = vmatprep.subr.mxu0 0.0
    %237 = vmatpush1.msra.mxu0 0.0
    %238 = vmatprep.subr.mxu0 0.0
    %239 = vmatpush1.msra.mxu0 0.0
    %240 = vmatprep.subr.mxu0 0.0
    %241 = vmatpush1.msra.mxu0 0.0
    %242 = vmatprep.subr.mxu0 0.0
    %243 = vmatpush1.msra.mxu0 0.0
    %244 = vmatprep.subr.mxu0 0.0
    %245 = vmatpush1.msra.mxu0 0.0
    %246 = vmatprep.subr.mxu0 0.0
    %247 = vmatpush1.msra.mxu0 %v16
    %248 = vmatprep.subr.mxu0 0.0
    %249 = vmatpush1.msra.mxu0 %v15
    %250 = vmatprep.subr.mxu0 0.0
    %251 = vmatpush2.msra.mxu0 0.0
    %252 = vmatprep.subr.mxu0 0.0
    %253 = vmatpush2.msra.mxu0 0.0
    %254 = vmatprep.subr.mxu0 0.0
    %255 = vmatpush2.msra.mxu0 0.0
    %256 = vmatprep.subr.mxu0 0.0
    %257 = vmatpush2.msra.mxu0 0.0
    %258 = vmatprep.subr.mxu0 0.0
    %259 = vmatpush2.msra.mxu0 0.0
    %260 = vmatprep.subr.mxu0 0.0
    %261 = vmatpush2.msra.mxu0 0.0
    %262 = vmatprep.subr.mxu0 0.0
    %263 = vmatpush2.msra.mxu0 0.0
    %264 = vmatprep.subr.mxu0 0.0
    %265 = vmatpush2.msra.mxu0 0.0
    %266 = vmatprep.subr.mxu0 0.0
    %267 = vmatpush2.msra.mxu0 0.0
    %268 = vmatprep.subr.mxu0 0.0
    %269 = vmatpush2.msra.mxu0 0.0
    %270 = vmatprep.subr.mxu0 0.0
    %271 = vmatpush2.msra.mxu0 0.0
    %272 = vmatprep.subr.mxu0 0.0
    %273 = vmatpush2.msra.mxu0 0.0
    %274 = vmatprep.subr.mxu0 0.0
    %275 = vmatpush2.msra.mxu0 0.0
    %276 = vmatprep.subr.mxu0 0.0
    %277 = vmatpush2.msra.mxu0 0.0
    %278 = vmatprep.subr.mxu0 0.0
    %279 = vmatpush2.msra.mxu0 0.0
    %280 = vmatprep.subr.mxu0 0.0
    %281 = vmatpush2.msra.mxu0 0.0
    %282 = vmatprep.mubr.f32.mxu0 0.0
    %283 = vmatmul.mubr.f32.gmra.mxu0 %v216
    %v284 = vpop.f32.mrf.mxu0
    %v285 = vadd.f32 0.0, %v284
    %v286 = vpop.f32.mrf.mxu0
    %287 = vdwg.mxu0
    %v289 = vrot.slane %v285, 6
    %v291 = vadd.f32 %v36, %v289
    %v292 = vtanh.pop %v291
    %v293 = vrot.slane %v19, 6
    %v295 = vmul.f32 %v292, %v293
    %vm296 = vcmask 124930
    %v297 = vsel %vm296, %v295, 0.0
    %298 = vadd.xlane.f32.xlu0 %v297
    %v299 = vpop.xlane.xlu0 %298
    %vm300 = vcmp.eq.s32.totalorder %v38, 2
    %v302 = vrot.slane %v213, 7
    %v304 = vsel %vm300, %v299, %v302
    %v306 = vrot.slane %v292, 2
    %v307 = vsel %vm40, %v306, 0
    %309 = vmatprep.subr.mxu0 0.0
    %310 = vmatpush1.msra.mxu0 0.0
    %311 = vmatprep.subr.mxu0 0.0
    %312 = vmatpush1.msra.mxu0 0.0
    %313 = vmatprep.subr.mxu0 0.0
    %314 = vmatpush1.msra.mxu0 0.0
    %315 = vmatprep.subr.mxu0 0.0
    %316 = vmatpush1.msra.mxu0 0.0
    %317 = vmatprep.subr.mxu0 0.0
    %318 = vmatpush1.msra.mxu0 0.0
    %319 = vmatprep.subr.mxu0 0.0
    %320 = vmatpush1.msra.mxu0 0.0
    %321 = vmatprep.subr.mxu0 0.0
    %322 = vmatpush1.msra.mxu0 0.0
    %323 = vmatprep.subr.mxu0 0.0
    %324 = vmatpush1.msra.mxu0 0.0
    %325 = vmatprep.subr.mxu0 0.0
    %326 = vmatpush1.msra.mxu0 0.0
    %327 = vmatprep.subr.mxu0 0.0
    %328 = vmatpush1.msra.mxu0 0.0
    %329 = vmatprep.subr.mxu0 0.0
    %330 = vmatpush1.msra.mxu0 0.0
    %331 = vmatprep.subr.mxu0 0.0
    %332 = vmatpush1.msra.mxu0 0.0
    %333 = vmatprep.subr.mxu0 0.0
    %334 = vmatpush1.msra.mxu0 0.0
    %335 = vmatprep.subr.mxu0 0.0
    %336 = vmatpush1.msra.mxu0 0.0
    %337 = vmatprep.subr.mxu0 0.0
    %338 = vmatpush1.msra.mxu0 %v16
    %339 = vmatprep.subr.mxu0 0.0
    %340 = vmatpush1.msra.mxu0 %v15
    %341 = vmatprep.subr.mxu0 0.0
    %342 = vmatpush2.msra.mxu0 0.0
    %343 = vmatprep.subr.mxu0 0.0
    %344 = vmatpush2.msra.mxu0 0.0
    %345 = vmatprep.subr.mxu0 0.0
    %346 = vmatpush2.msra.mxu0 0.0
    %347 = vmatprep.subr.mxu0 0.0
    %348 = vmatpush2.msra.mxu0 0.0
    %349 = vmatprep.subr.mxu0 0.0
    %350 = vmatpush2.msra.mxu0 0.0
    %351 = vmatprep.subr.mxu0 0.0
    %352 = vmatpush2.msra.mxu0 0.0
    %353 = vmatprep.subr.mxu0 0.0
    %354 = vmatpush2.msra.mxu0 0.0
    %355 = vmatprep.subr.mxu0 0.0
    %356 = vmatpush2.msra.mxu0 0.0
    %357 = vmatprep.subr.mxu0 0.0
    %358 = vmatpush2.msra.mxu0 0.0
    %359 = vmatprep.subr.mxu0 0.0
    %360 = vmatpush2.msra.mxu0 0.0
    %361 = vmatprep.subr.mxu0 0.0
    %362 = vmatpush2.msra.mxu0 0.0
    %363 = vmatprep.subr.mxu0 0.0
    %364 = vmatpush2.msra.mxu0 0.0
    %365 = vmatprep.subr.mxu0 0.0
    %366 = vmatpush2.msra.mxu0 0.0
    %367 = vmatprep.subr.mxu0 0.0
    %368 = vmatpush2.msra.mxu0 0.0
    %369 = vmatprep.subr.mxu0 0.0
    %370 = vmatpush2.msra.mxu0 0.0
    %371 = vmatprep.subr.mxu0 0.0
    %372 = vmatpush2.msra.mxu0 0.0
    %373 = vmatprep.mubr.f32.mxu0 0.0
    %374 = vmatmul.mubr.f32.gmra.mxu0 %v307
    %v375 = vpop.f32.mrf.mxu0
    %v376 = vadd.f32 0.0, %v375
    %v377 = vpop.f32.mrf.mxu0
    %378 = vdwg.mxu0
    %v380 = vrot.slane %v376, 5
    %v382 = vadd.f32 %v36, %v380
    %v383 = vtanh.pop %v382
    %v384 = vrot.slane %v19, 5
    %v386 = vmul.f32 %v383, %v384
    %vm387 = vcmask 125955
    %v388 = vsel %vm387, %v386, 0.0
    %389 = vadd.xlane.f32.xlu0 %v388
    %v390 = vpop.xlane.xlu0 %389
    %vm391 = vcmp.eq.s32.totalorder %v38, 3
    %v393 = vrot.slane %v304, 7
    %v395 = vsel %vm391, %v390, %v393
    %v397 = vrot.slane %v383, 3
    %v398 = vsel %vm40, %v397, 0
    %400 = vmatprep.subr.mxu0 0.0
    %401 = vmatpush1.msra.mxu0 0.0
    %402 = vmatprep.subr.mxu0 0.0
    %403 = vmatpush1.msra.mxu0 0.0
    %404 = vmatprep.subr.mxu0 0.0
    %405 = vmatpush1.msra.mxu0 0.0
    %406 = vmatprep.subr.mxu0 0.0
    %407 = vmatpush1.msra.mxu0 0.0
    %408 = vmatprep.subr.mxu0 0.0
    %409 = vmatpush1.msra.mxu0 0.0
    %410 = vmatprep.subr.mxu0 0.0
    %411 = vmatpush1.msra.mxu0 0.0
    %412 = vmatprep.subr.mxu0 0.0
    %413 = vmatpush1.msra.mxu0 0.0
    %414 = vmatprep.subr.mxu0 0.0
    %415 = vmatpush1.msra.mxu0 0.0
    %416 = vmatprep.subr.mxu0 0.0
    %417 = vmatpush1.msra.mxu0 0.0
    %418 = vmatprep.subr.mxu0 0.0
    %419 = vmatpush1.msra.mxu0 0.0
    %420 = vmatprep.subr.mxu0 0.0
    %421 = vmatpush1.msra.mxu0 0.0
    %422 = vmatprep.subr.mxu0 0.0
    %423 = vmatpush1.msra.mxu0 0.0
    %424 = vmatprep.subr.mxu0 0.0
    %425 = vmatpush1.msra.mxu0 0.0
    %426 = vmatprep.subr.mxu0 0.0
    %427 = vmatpush1.msra.mxu0 0.0
    %428 = vmatprep.subr.mxu0 0.0
    %429 = vmatpush1.msra.mxu0 %v16
    %430 = vmatprep.subr.mxu0 0.0
    %431 = vmatpush1.msra.mxu0 %v15
    %432 = vmatprep.subr.mxu0 0.0
    %433 = vmatpush2.msra.mxu0 0.0
    %434 = vmatprep.subr.mxu0 0.0
    %435 = vmatpush2.msra.mxu0 0.0
    %436 = vmatprep.subr.mxu0 0.0
    %437 = vmatpush2.msra.mxu0 0.0
    %438 = vmatprep.subr.mxu0 0.0
    %439 = vmatpush2.msra.mxu0 0.0
    %440 = vmatprep.subr.mxu0 0.0
    %441 = vmatpush2.msra.mxu0 0.0
    %442 = vmatprep.subr.mxu0 0.0
    %443 = vmatpush2.msra.mxu0 0.0
    %444 = vmatprep.subr.mxu0 0.0
    %445 = vmatpush2.msra.mxu0 0.0
    %446 = vmatprep.subr.mxu0 0.0
    %447 = vmatpush2.msra.mxu0 0.0
    %448 = vmatprep.subr.mxu0 0.0
    %449 = vmatpush2.msra.mxu0 0.0
    %450 = vmatprep.subr.mxu0 0.0
    %451 = vmatpush2.msra.mxu0 0.0
    %452 = vmatprep.subr.mxu0 0.0
    %453 = vmatpush2.msra.mxu0 0.0
    %454 = vmatprep.subr.mxu0 0.0
    %455 = vmatpush2.msra.mxu0 0.0
    %456 = vmatprep.subr.mxu0 0.0
    %457 = vmatpush2.msra.mxu0 0.0
    %458 = vmatprep.subr.mxu0 0.0
    %459 = vmatpush2.msra.mxu0 0.0
    %460 = vmatprep.subr.mxu0 0.0
    %461 = vmatpush2.msra.mxu0 0.0
    %462 = vmatprep.subr.mxu0 0.0
    %463 = vmatpush2.msra.mxu0 0.0
    %464 = vmatprep.mubr.f32.mxu0 0.0
    %465 = vmatmul.mubr.f32.gmra.mxu0 %v398
    %v466 = vpop.f32.mrf.mxu0
    %v467 = vadd.f32 0.0, %v466
    %v468 = vpop.f32.mrf.mxu0
    %469 = vdwg.mxu0
    %v471 = vrot.slane %v467, 4
    %v473 = vadd.f32 %v36, %v471
    %v474 = vtanh.pop %v473
    %v475 = vrot.slane %v19, 4
    %v477 = vmul.f32 %v474, %v475
    %vm478 = vcmask 126980
    %v479 = vsel %vm478, %v477, 0.0
    %480 = vadd.xlane.f32.xlu0 %v479
    %v481 = vpop.xlane.xlu0 %480
    %vm482 = vcmp.eq.s32.totalorder %v38, 4
    %v484 = vrot.slane %v395, 7
    %v486 = vsel %vm482, %v481, %v484
    %v488 = vrot.slane %v474, 4
    %v489 = vsel %vm40, %v488, 0
    %491 = vmatprep.subr.mxu0 0.0
    %492 = vmatpush1.msra.mxu0 0.0
    %493 = vmatprep.subr.mxu0 0.0
    %494 = vmatpush1.msra.mxu0 0.0
    %495 = vmatprep.subr.mxu0 0.0
    %496 = vmatpush1.msra.mxu0 0.0
    %497 = vmatprep.subr.mxu0 0.0
    %498 = vmatpush1.msra.mxu0 0.0
    %499 = vmatprep.subr.mxu0 0.0
    %500 = vmatpush1.msra.mxu0 0.0
    %501 = vmatprep.subr.mxu0 0.0
    %502 = vmatpush1.msra.mxu0 0.0
    %503 = vmatprep.subr.mxu0 0.0
    %504 = vmatpush1.msra.mxu0 0.0
    %505 = vmatprep.subr.mxu0 0.0
    %506 = vmatpush1.msra.mxu0 0.0
    %507 = vmatprep.subr.mxu0 0.0
    %508 = vmatpush1.msra.mxu0 0.0
    %509 = vmatprep.subr.mxu0 0.0
    %510 = vmatpush1.msra.mxu0 0.0
    %511 = vmatprep.subr.mxu0 0.0
    %512 = vmatpush1.msra.mxu0 0.0
    %513 = vmatprep.subr.mxu0 0.0
    %514 = vmatpush1.msra.mxu0 0.0
    %515 = vmatprep.subr.mxu0 0.0
    %516 = vmatpush1.msra.mxu0 0.0
    %517 = vmatprep.subr.mxu0 0.0
    %518 = vmatpush1.msra.mxu0 0.0
    %519 = vmatprep.subr.mxu0 0.0
    %520 = vmatpush1.msra.mxu0 %v16
    %521 = vmatprep.subr.mxu0 0.0
    %522 = vmatpush1.msra.mxu0 %v15
    %523 = vmatprep.subr.mxu0 0.0
    %524 = vmatpush2.msra.mxu0 0.0
    %525 = vmatprep.subr.mxu0 0.0
    %526 = vmatpush2.msra.mxu0 0.0
    %527 = vmatprep.subr.mxu0 0.0
    %528 = vmatpush2.msra.mxu0 0.0
    %529 = vmatprep.subr.mxu0 0.0
    %530 = vmatpush2.msra.mxu0 0.0
    %531 = vmatprep.subr.mxu0 0.0
    %532 = vmatpush2.msra.mxu0 0.0
    %533 = vmatprep.subr.mxu0 0.0
    %534 = vmatpush2.msra.mxu0 0.0
    %535 = vmatprep.subr.mxu0 0.0
    %536 = vmatpush2.msra.mxu0 0.0
    %537 = vmatprep.subr.mxu0 0.0
    %538 = vmatpush2.msra.mxu0 0.0
    %539 = vmatprep.subr.mxu0 0.0
    %540 = vmatpush2.msra.mxu0 0.0
    %541 = vmatprep.subr.mxu0 0.0
    %542 = vmatpush2.msra.mxu0 0.0
    %543 = vmatprep.subr.mxu0 0.0
    %544 = vmatpush2.msra.mxu0 0.0
    %545 = vmatprep.subr.mxu0 0.0
    %546 = vmatpush2.msra.mxu0 0.0
    %547 = vmatprep.subr.mxu0 0.0
    %548 = vmatpush2.msra.mxu0 0.0
    %549 = vmatprep.subr.mxu0 0.0
    %550 = vmatpush2.msra.mxu0 0.0
    %551 = vmatprep.subr.mxu0 0.0
    %552 = vmatpush2.msra.mxu0 0.0
    %553 = vmatprep.subr.mxu0 0.0
    %554 = vmatpush2.msra.mxu0 0.0
    %555 = vmatprep.mubr.f32.mxu0 0.0
    %556 = vmatmul.mubr.f32.gmra.mxu0 %v489
    %v557 = vpop.f32.mrf.mxu0
    %v558 = vadd.f32 0.0, %v557
    %v559 = vpop.f32.mrf.mxu0
    %560 = vdwg.mxu0
    %v562 = vrot.slane %v558, 3
    %v564 = vadd.f32 %v36, %v562
    %v565 = vtanh.pop %v564
    %v566 = vrot.slane %v19, 3
    %v568 = vmul.f32 %v565, %v566
    %vm569 = vcmask 128005
    %v570 = vsel %vm569, %v568, 0.0
    %571 = vadd.xlane.f32.xlu0 %v570
    %v572 = vpop.xlane.xlu0 %571
    %vm573 = vcmp.eq.s32.totalorder %v38, 5
    %v575 = vrot.slane %v486, 7
    %v577 = vsel %vm573, %v572, %v575
    %v579 = vrot.slane %v565, 5
    %v580 = vsel %vm40, %v579, 0
    %582 = vmatprep.subr.mxu0 0.0
    %583 = vmatpush1.msra.mxu0 0.0
    %584 = vmatprep.subr.mxu0 0.0
    %585 = vmatpush1.msra.mxu0 0.0
    %586 = vmatprep.subr.mxu0 0.0
    %587 = vmatpush1.msra.mxu0 0.0
    %588 = vmatprep.subr.mxu0 0.0
    %589 = vmatpush1.msra.mxu0 0.0
    %590 = vmatprep.subr.mxu0 0.0
    %591 = vmatpush1.msra.mxu0 0.0
    %592 = vmatprep.subr.mxu0 0.0
    %593 = vmatpush1.msra.mxu0 0.0
    %594 = vmatprep.subr.mxu0 0.0
    %595 = vmatpush1.msra.mxu0 0.0
    %596 = vmatprep.subr.mxu0 0.0
    %597 = vmatpush1.msra.mxu0 0.0
    %598 = vmatprep.subr.mxu0 0.0
    %599 = vmatpush1.msra.mxu0 0.0
    %600 = vmatprep.subr.mxu0 0.0
    %601 = vmatpush1.msra.mxu0 0.0
    %602 = vmatprep.subr.mxu0 0.0
    %603 = vmatpush1.msra.mxu0 0.0
    %604 = vmatprep.subr.mxu0 0.0
    %605 = vmatpush1.msra.mxu0 0.0
    %606 = vmatprep.subr.mxu0 0.0
    %607 = vmatpush1.msra.mxu0 0.0
    %608 = vmatprep.subr.mxu0 0.0
    %609 = vmatpush1.msra.mxu0 0.0
    %610 = vmatprep.subr.mxu0 0.0
    %611 = vmatpush1.msra.mxu0 %v16
    %612 = vmatprep.subr.mxu0 0.0
    %613 = vmatpush1.msra.mxu0 %v15
    %614 = vmatprep.subr.mxu0 0.0
    %615 = vmatpush2.msra.mxu0 0.0
    %616 = vmatprep.subr.mxu0 0.0
    %617 = vmatpush2.msra.mxu0 0.0
    %618 = vmatprep.subr.mxu0 0.0
    %619 = vmatpush2.msra.mxu0 0.0
    %620 = vmatprep.subr.mxu0 0.0
    %621 = vmatpush2.msra.mxu0 0.0
    %622 = vmatprep.subr.mxu0 0.0
    %623 = vmatpush2.msra.mxu0 0.0
    %624 = vmatprep.subr.mxu0 0.0
    %625 = vmatpush2.msra.mxu0 0.0
    %626 = vmatprep.subr.mxu0 0.0
    %627 = vmatpush2.msra.mxu0 0.0
    %628 = vmatprep.subr.mxu0 0.0
    %629 = vmatpush2.msra.mxu0 0.0
    %630 = vmatprep.subr.mxu0 0.0
    %631 = vmatpush2.msra.mxu0 0.0
    %632 = vmatprep.subr.mxu0 0.0
    %633 = vmatpush2.msra.mxu0 0.0
    %634 = vmatprep.subr.mxu0 0.0
    %635 = vmatpush2.msra.mxu0 0.0
    %636 = vmatprep.subr.mxu0 0.0
    %637 = vmatpush2.msra.mxu0 0.0
    %638 = vmatprep.subr.mxu0 0.0
    %639 = vmatpush2.msra.mxu0 0.0
    %640 = vmatprep.subr.mxu0 0.0
    %641 = vmatpush2.msra.mxu0 0.0
    %642 = vmatprep.subr.mxu0 0.0
    %643 = vmatpush2.msra.mxu0 0.0
    %644 = vmatprep.subr.mxu0 0.0
    %645 = vmatpush2.msra.mxu0 0.0
    %646 = vmatprep.mubr.f32.mxu0 0.0
    %647 = vmatmul.mubr.f32.gmra.mxu0 %v580
    %v648 = vpop.f32.mrf.mxu0
    %v649 = vadd.f32 0.0, %v648
    %v650 = vpop.f32.mrf.mxu0
    %651 = vdwg.mxu0
    %v653 = vrot.slane %v649, 2
    %v655 = vadd.f32 %v36, %v653
    %v656 = vtanh.pop %v655
    %v657 = vrot.slane %v19, 2
    %v659 = vmul.f32 %v656, %v657
    %vm660 = vcmask 129030
    %v661 = vsel %vm660, %v659, 0.0
    %662 = vadd.xlane.f32.xlu0 %v661
    %v663 = vpop.xlane.xlu0 %662
    %vm664 = vcmp.eq.s32.totalorder %v38, 6
    %v666 = vrot.slane %v577, 7
    %v668 = vsel %vm664, %v663, %v666
    %v670 = vrot.slane %v656, 6
    %v671 = vsel %vm40, %v670, 0
    %673 = vmatprep.subr.mxu0 0.0
    %674 = vmatpush1.msra.mxu0 0.0
    %675 = vmatprep.subr.mxu0 0.0
    %676 = vmatpush1.msra.mxu0 0.0
    %677 = vmatprep.subr.mxu0 0.0
    %678 = vmatpush1.msra.mxu0 0.0
    %679 = vmatprep.subr.mxu0 0.0
    %680 = vmatpush1.msra.mxu0 0.0
    %681 = vmatprep.subr.mxu0 0.0
    %682 = vmatpush1.msra.mxu0 0.0
    %683 = vmatprep.subr.mxu0 0.0
    %684 = vmatpush1.msra.mxu0 0.0
    %685 = vmatprep.subr.mxu0 0.0
    %686 = vmatpush1.msra.mxu0 0.0
    %687 = vmatprep.subr.mxu0 0.0
    %688 = vmatpush1.msra.mxu0 0.0
    %689 = vmatprep.subr.mxu0 0.0
    %690 = vmatpush1.msra.mxu0 0.0
    %691 = vmatprep.subr.mxu0 0.0
    %692 = vmatpush1.msra.mxu0 0.0
    %693 = vmatprep.subr.mxu0 0.0
    %694 = vmatpush1.msra.mxu0 0.0
    %695 = vmatprep.subr.mxu0 0.0
    %696 = vmatpush1.msra.mxu0 0.0
    %697 = vmatprep.subr.mxu0 0.0
    %698 = vmatpush1.msra.mxu0 0.0
    %699 = vmatprep.subr.mxu0 0.0
    %700 = vmatpush1.msra.mxu0 0.0
    %701 = vmatprep.subr.mxu0 0.0
    %702 = vmatpush1.msra.mxu0 %v16
    %703 = vmatprep.subr.mxu0 0.0
    %704 = vmatpush1.msra.mxu0 %v15
    %705 = vmatprep.subr.mxu0 0.0
    %706 = vmatpush2.msra.mxu0 0.0
    %707 = vmatprep.subr.mxu0 0.0
    %708 = vmatpush2.msra.mxu0 0.0
    %709 = vmatprep.subr.mxu0 0.0
    %710 = vmatpush2.msra.mxu0 0.0
    %711 = vmatprep.subr.mxu0 0.0
    %712 = vmatpush2.msra.mxu0 0.0
    %713 = vmatprep.subr.mxu0 0.0
    %714 = vmatpush2.msra.mxu0 0.0
    %715 = vmatprep.subr.mxu0 0.0
    %716 = vmatpush2.msra.mxu0 0.0
    %717 = vmatprep.subr.mxu0 0.0
    %718 = vmatpush2.msra.mxu0 0.0
    %719 = vmatprep.subr.mxu0 0.0
    %720 = vmatpush2.msra.mxu0 0.0
    %721 = vmatprep.subr.mxu0 0.0
    %722 = vmatpush2.msra.mxu0 0.0
    %723 = vmatprep.subr.mxu0 0.0
    %724 = vmatpush2.msra.mxu0 0.0
    %725 = vmatprep.subr.mxu0 0.0
    %726 = vmatpush2.msra.mxu0 0.0
    %727 = vmatprep.subr.mxu0 0.0
    %728 = vmatpush2.msra.mxu0 0.0
    %729 = vmatprep.subr.mxu0 0.0
    %730 = vmatpush2.msra.mxu0 0.0
    %731 = vmatprep.subr.mxu0 0.0
    %732 = vmatpush2.msra.mxu0 0.0
    %733 = vmatprep.subr.mxu0 0.0
    %734 = vmatpush2.msra.mxu0 0.0
    %735 = vmatprep.subr.mxu0 0.0
    %736 = vmatpush2.msra.mxu0 0.0
    %737 = vmatprep.mubr.f32.mxu0 0.0
    %738 = vmatmul.mubr.f32.gmra.mxu0 %v671
    %v739 = vpop.f32.mrf.mxu0
    %v740 = vadd.f32 0.0, %v739
    %v741 = vpop.f32.mrf.mxu0
    %742 = vdwg.mxu0
    %v744 = vrot.slane %v740, 1
    %v746 = vadd.f32 %v36, %v744
    %v747 = vtanh.pop %v746
    %v748 = vrot.slane %v19, 1
    %v750 = vmul.f32 %v747, %v748
    %vm751 = vcmask 130055
    %v752 = vsel %vm751, %v750, 0.0
    %753 = vadd.xlane.f32.xlu0 %v752
    %v754 = vpop.xlane.xlu0 %753
    %vm755 = vcmp.eq.s32.totalorder %v38, 7
    %v757 = vrot.slane %v668, 7
    %v759 = vsel %vm755, %v754, %v757
    %v761 = vrot.slane %v20, 1
    %v763 = vadd.f32 %v759, %v761
    %v765 = vrot.slane %v747, 7
    %v768 = vrot.slane %v763, 6
    %vm770 = vcmask 1040384
    %v771 = vsel %vm770, %v765, %v768
    %vm772 = vcmask 123904
    %773 = vst.msk [vmem:[#allocation2] sm:$0x3] %vm772, %v771
    // Predicated region
    $region14: #{tpu_custom_call.1} parent=1 // pred_check
      _
    $region15: #{tpu_custom_call.1} parent=1 // pred_check_branch
      %775 = sbr.rel (0) target = $region17
    $region16: #{tpu_custom_call.1} parent=1 // pred_region
      %s777 = ssub.s32 32, 32
      %778 = vsyncadd [#allocation3], %s777
      %s780 = sshll.u32 [#allocation2], 4
      %s781 = int_to_ptr.vmem [resolvable:$true] %s780
      %783 = dma.vmem_to_hbm [thread:$0]  %s781, 32, %s3, [#allocation3]
    $region17: #{tpu_custom_call.1} parent=1 // pred_fallthru
      _
    // Predicated region
    $region18: #{tpu_custom_call.1} parent=1 // pred_check
      _
    $region19: #{tpu_custom_call.1} parent=1 // pred_check_branch
      %785 = sbr.rel (0) target = $region21
    $region20: #{tpu_custom_call.1} parent=1 // pred_region
      %786 = dma.done [#allocation3], 32
    $region21: #{tpu_custom_call.1} parent=1 // pred_fallthru
      _
    %787 = vsyncpa [#allocation3], 1

</llo_original>
